<compile_context>
chip_gen: v5e
topology: v5e:2x2
jax: 0.10.0
libtpu: 0.0.40
codegen_flags: <defaults>
</compile_context>

<pallas_src>
import functools

import jax
import jax.numpy as jnp
from jax import lax
from jax.experimental import pallas as pl
from jax.experimental.pallas import tpu as pltpu

EPS = 1e-5  # PyTorch BatchNorm2d default


def _vmem_limit_bytes():
    """Generation-aware scoped-VMEM limit with double-buffer headroom."""
    cap = 128 * 1024 * 1024
    try:
        info = pltpu.get_tpu_info()
        cap = int(getattr(info, "vmem_capacity_bytes", cap))
    except Exception:
        pass  # fall back to a conservative default if no TPU info is available
    # ~60% of physical VMEM (≈38 MiB on v7x's 64 MiB, more on v5e/v6e's 128 MiB)
    return max(16 * 1024 * 1024, min(int(cap * 0.6), 96 * 1024 * 1024))


def _pick_row_group(H, W):
    """Smallest divisor k of H making the output row 4kW lane-dense (>=128)
    while keeping the expansion contraction depth kW <= 128."""
    if 4 * W >= 128:
        return 1
    divs = [d for d in range(1, H + 1) if H % d == 0]
    for d in divs:
        if 4 * d * W >= 128 and d * W <= 128:
            return d
    best = 1
    for d in divs:  # no divisor reaches 128 lanes; take the densest K<=128 one
        if d * W <= 128:
            best = d
    return best


def _pick_channel_block(N, C, HK, KW, vmem_limit_bytes):
    """Channel block size: fit VMEM, prefer many (even) grid steps."""
    # ~double-buffered input (2x) + output (2*4x) tiles + live f32 temps
    # (x, y, z ≈ 6x) + margin -> ~20x the per-channel input slab.
    per_channel = 20 * N * HK * KW * 4
    tile_budget = min(vmem_limit_bytes // 4, 8 * 1024 * 1024)
    max_cb = tile_budget // per_channel
    cands = [d for d in range(1, C + 1) if C % d == 0 and d <= max_cb]
    if not cands:
        # TODO(synk): two-pass (stats, then normalize+upsample) H-tiled variant
        # for channels whose (N, H, W) slab does not fit VMEM; CB=1 fallback
        # may exceed the scoped limit for very large feature maps.
        return 1

    def steps(d):
        return C // d

    for min_steps, need_even in ((8, True), (4, True), (2, True), (2, False), (1, False)):
        ok = [d for d in cands
              if steps(d) >= min_steps and (not need_even or steps(d) % 2 == 0)]
        if ok:
            return max(ok)
    return 1


def _make_expand(k, W, w_chunk):
    """Constant 0/1 expansion matrix (built once in the wrapper, f32-exact)."""
    if w_chunk is not None:
        # Per-chunk W interleave: E[j, 2j] = E[j, 2j+1] = 1.   (w_chunk, 2*w_chunk)
        j = jnp.arange(w_chunk)[:, None]
        q = jnp.arange(2 * w_chunk)[None, :]
        return (q // 2 == j).astype(jnp.float32)
    # Folded W+H duplication over a group of k input rows:   (kW, 4kW)
    # input p = r*W + j  ->  outputs {r*4W + 2j, +1, r*4W + 2W + 2j, +1}.
    KW = k * W
    p = jnp.arange(KW)[:, None]
    q = jnp.arange(4 * KW)[None, :]
    same_row = (q // (4 * W)) == (p // W)
    same_col = ((q % (2 * W)) // 2) == (p % W)
    return (same_row & same_col).astype(jnp.float32)


def _reduce_nhw(t):
    """Sum over batch + spatial axes, keep channel: (N, CB, HK, KW) -> (1, CB, 1, 1)."""
    t = jnp.sum(t, axis=3, keepdims=True)
    t = jnp.sum(t, axis=2, keepdims=True)
    return jnp.sum(t, axis=0, keepdims=True)


def _up_bn_kernel(x_ref, expand_ref, gamma_ref, beta_ref, out_ref, *, w_chunk):
    # x_ref:      (N, CB, HK, KW)   grouped-rows view of one channel block
    # expand_ref: (KW, 4KW) folded expansion, or (w_chunk, 2*w_chunk) chunked
    # gamma_ref:  (1, CB, 1, 1)
    # beta_ref:   (1, CB, 1, 1)
    # out_ref:    (N, CB, HK, 4KW)  grouped-rows view of the (2H, 2W) output
    N, CB, HK, KW = x_ref.shape
    n_elem = N * HK * KW

    x = x_ref[...].astype(jnp.float32)

    # BatchNorm2d training-mode statistics (biased variance), per channel.
    # Pre-upsample stats == post-upsample stats under exact 4x replication.
    mean = _reduce_nhw(x) / n_elem                       # (1, CB, 1, 1)
    centered = x - mean
    var = _reduce_nhw(centered * centered) / n_elem
    inv_std = lax.rsqrt(var + EPS)

    scale = gamma_ref[...] * inv_std                     # (1, CB, 1, 1)
    shift = beta_ref[...] - mean * scale
    # x*scale + shift == (x - mean)*inv_std*gamma + beta; `centered` need not
    # stay live through the matmul/store phase.
    y = x * scale + shift                                # (N, CB, HK, KW)
    y2 = y.reshape(N * CB * HK, KW)                      # collapse majors (free)

    expand = expand_ref[...]
    if w_chunk is None:
        # Folded path: W- and H-duplication in one 0/1 matmul on the MXU,
        # single full-width lane-dense store. Exact in f32.
        z = jnp.dot(y2, expand, preferred_element_type=jnp.float32)
        out_ref[...] = z.reshape(N, CB, HK, 4 * KW).astype(out_ref.dtype)
    else:
        # Chunked path (k == 1, large W): contraction depth capped at w_chunk
        # MACs per output; each chunk's result is stored to both H-duplicated
        # halves of the output row (2*w_chunk-wide, 128-aligned stores).
        W = KW
        for c in range(W // w_chunk):
            yc = y2[:, c * w_chunk:(c + 1) * w_chunk]
            zc = jnp.dot(yc, expand, preferred_element_type=jnp.float32)
            zc = zc.reshape(N, CB, HK, 2 * w_chunk).astype(out_ref.dtype)
            base = 2 * c * w_chunk
            out_ref[:, :, :, base:base + 2 * w_chunk] = zc
            out_ref[:, :, :, 2 * W + base:2 * W + base + 2 * w_chunk] = zc


def up_bn2d(x, gamma, beta):
    """x: (N, C, H, W) float32 -> (N, C, 2H, 2W) (nearest 2x Upsample -> BN2d)."""
    N, C, H, W = x.shape
    k = _pick_row_group(H, W)
    HK, KW = H // k, k * W

    vmem_limit = _vmem_limit_bytes()
    CB = _pick_channel_block(N, C, HK, KW, vmem_limit)

    chunked = (k == 1 and W > 128 and W % 128 == 0)
    w_chunk = 128 if chunked else None
    expand = _make_expand(k, W, w_chunk)

    xg = x.reshape(N, C, HK, KW)                         # free row-major reshape
    g4 = gamma.reshape(1, C, 1, 1).astype(jnp.float32)
    b4 = beta.reshape(1, C, 1, 1).astype(jnp.float32)

    if w_chunk is None:
        mm_flops = 2 * (N * C * HK) * KW * (4 * KW)
    else:
        mm_flops = 2 * (N * C * H) * W * (2 * w_chunk)
    cost = pl.CostEstimate(
        flops=int(mm_flops + 10 * N * C * H * W),
        transcendentals=int(C),
        bytes_accessed=int(5 * N * C * H * W * x.dtype.itemsize),  # 1x read + 4x write
    )

    kernel = functools.partial(_up_bn_kernel, w_chunk=w_chunk)

    out_view = pl.pallas_call(
        kernel,
        grid=(C // CB,),
        in_specs=[
            pl.BlockSpec((N, CB, HK, KW), lambda c: (0, c, 0, 0)),
            # Constant block index: expansion matrix is fetched once and stays
            # VMEM-resident across all grid steps.
            pl.BlockSpec(expand.shape, lambda c: (0, 0)),
            pl.BlockSpec((1, CB, 1, 1), lambda c: (0, c, 0, 0)),
            pl.BlockSpec((1, CB, 1, 1), lambda c: (0, c, 0, 0)),
        ],
        out_specs=pl.BlockSpec((N, CB, HK, 4 * KW), lambda c: (0, c, 0, 0)),
        out_shape=jax.ShapeDtypeStruct((N, C, HK, 4 * KW), x.dtype),
        compiler_params=pltpu.CompilerParams(
            dimension_semantics=("parallel",),
            vmem_limit_bytes=vmem_limit,
        ),
        cost_estimate=cost,
    )(xg, expand, g4, b4)

    # (N, C, H/k, 4kW) -> (N, C, 2H, 2W): pure row-major metadata reshape,
    # no transpose, no extra HBM pass.
    return out_view.reshape(N, C, 2 * H, 2 * W)


def _reference(x, gamma, beta):
    up = jnp.repeat(jnp.repeat(x, 2, axis=2), 2, axis=3)
    mean = jnp.mean(up, axis=(0, 2, 3), keepdims=True)
    var = jnp.var(up, axis=(0, 2, 3), keepdims=True)          # biased
    y = (up - mean) / jnp.sqrt(var + EPS)
    return y * gamma[None, :, None, None] + beta[None, :, None, None]


if __name__ == "__main__":
    key = jax.random.PRNGKey(0)
    kx, kg, kb, kx2 = jax.random.split(key, 4)

    # Primary shape (exercises the folded, row-grouped lane-dense path: k=2).
    N, C, H, W = 2, 4, 16, 16
    x = jax.random.normal(kx, (N, C, H, W), dtype=jnp.float32)
    gamma = 1.0 + 0.1 * jax.random.normal(kg, (C,), dtype=jnp.float32)
    beta = 0.1 * jax.random.normal(kb, (C,), dtype=jnp.float32)

    out = jax.block_until_ready(up_bn2d(x, gamma, beta))
    ref = _reference(x, gamma, beta)
    assert out.shape == (N, C, 2 * H, 2 * W), out.shape
    err = float(jnp.max(jnp.abs(out - ref)))
    assert jnp.allclose(out, ref, atol=1e-4, rtol=1e-4), f"mismatch, max err {err}"

    # Secondary small shape (exercises the chunked large-W path: W=256 > 128).
    N2, C2, H2, W2 = 1, 2, 4, 256
    x2 = jax.random.normal(kx2, (N2, C2, H2, W2), dtype=jnp.float32)
    out2 = jax.block_until_ready(up_bn2d(x2, gamma[:C2], beta[:C2]))
    ref2 = _reference(x2, gamma[:C2], beta[:C2])
    assert out2.shape == (N2, C2, 2 * H2, 2 * W2), out2.shape
    err2 = float(jnp.max(jnp.abs(out2 - ref2)))
    assert jnp.allclose(out2, ref2, atol=1e-4, rtol=1e-4), f"mismatch, max err {err2}"

    print("KERNEL_OK")
</pallas_src>

<mosaic_0001>
module attributes {stable_mosaic.version = 11 : i64} {
  func.func @_up_bn_kernel(%arg0: i32, %arg1: memref<2x1x8x32xf32, #tpu.memory_space<vmem>>, %arg2: memref<32x128xf32, #tpu.memory_space<vmem>>, %arg3: memref<1x1x1x1xf32, #tpu.memory_space<vmem>>, %arg4: memref<1x1x1x1xf32, #tpu.memory_space<vmem>>, %arg5: memref<2x1x8x128xf32, #tpu.memory_space<vmem>>) attributes {dimension_semantics = [#tpu.dimension_semantics<parallel>], iteration_bounds = array<i64: 4>, scalar_prefetch = 0 : i64, scratch_operands = 0 : i64, tpu.core_type = #tpu.core_type<tc>, window_params = [{transform_indices = @transform_0, window_bounds = array<i64: 2, 1, 8, 32>}, {pipeline_mode = #tpu.pipeline_mode<synchronous>, transform_indices = @transform_1, window_bounds = array<i64: 32, 128>}, {transform_indices = @transform_2, window_bounds = array<i64: 1, 1, 1, 1>}, {transform_indices = @transform_3, window_bounds = array<i64: 1, 1, 1, 1>}, {transform_indices = @transform_4, window_bounds = array<i64: 2, 1, 8, 128>}]} {
    %c0 = arith.constant 0 : index
    %c0_0 = arith.constant 0 : index
    %c0_1 = arith.constant 0 : index
    %c0_2 = arith.constant 0 : index
    %0 = vector.load %arg1[%c0, %c0_0, %c0_1, %c0_2] : memref<2x1x8x32xf32, #tpu.memory_space<vmem>>, vector<2x1x8x32xf32>
    %cst = arith.constant dense<0.000000e+00> : vector<2x1x8xf32>
    %1 = vector.multi_reduction <add>, %0, %cst [3] : vector<2x1x8x32xf32> to vector<2x1x8xf32>
    %2 = vector.shape_cast %1 : vector<2x1x8xf32> to vector<2x1x8x1xf32>
    %cst_3 = arith.constant dense<0.000000e+00> : vector<2x1x1xf32>
    %3 = vector.multi_reduction <add>, %2, %cst_3 [2] : vector<2x1x8x1xf32> to vector<2x1x1xf32>
    %4 = vector.shape_cast %3 : vector<2x1x1xf32> to vector<2x1x1x1xf32>
    %cst_4 = arith.constant dense<0.000000e+00> : vector<1x1x1xf32>
    %5 = vector.multi_reduction <add>, %4, %cst_4 [0] : vector<2x1x1x1xf32> to vector<1x1x1xf32>
    %6 = vector.shape_cast %5 : vector<1x1x1xf32> to vector<1x1x1x1xf32>
    %cst_5 = arith.constant 5.120000e+02 : f32
    %7 = vector.broadcast %cst_5 : f32 to vector<1x1x1x1xf32>
    %8 = arith.divf %6, %7 : vector<1x1x1x1xf32>
    %9 = vector.broadcast %8 : vector<1x1x1x1xf32> to vector<2x1x8x32xf32>
    %10 = arith.subf %0, %9 : vector<2x1x8x32xf32>
    %11 = arith.mulf %10, %10 : vector<2x1x8x32xf32>
    %cst_6 = arith.constant dense<0.000000e+00> : vector<2x1x8xf32>
    %12 = vector.multi_reduction <add>, %11, %cst_6 [3] : vector<2x1x8x32xf32> to vector<2x1x8xf32>
    %13 = vector.shape_cast %12 : vector<2x1x8xf32> to vector<2x1x8x1xf32>
    %cst_7 = arith.constant dense<0.000000e+00> : vector<2x1x1xf32>
    %14 = vector.multi_reduction <add>, %13, %cst_7 [2] : vector<2x1x8x1xf32> to vector<2x1x1xf32>
    %15 = vector.shape_cast %14 : vector<2x1x1xf32> to vector<2x1x1x1xf32>
    %cst_8 = arith.constant dense<0.000000e+00> : vector<1x1x1xf32>
    %16 = vector.multi_reduction <add>, %15, %cst_8 [0] : vector<2x1x1x1xf32> to vector<1x1x1xf32>
    %17 = vector.shape_cast %16 : vector<1x1x1xf32> to vector<1x1x1x1xf32>
    %cst_9 = arith.constant 5.120000e+02 : f32
    %18 = vector.broadcast %cst_9 : f32 to vector<1x1x1x1xf32>
    %19 = arith.divf %17, %18 : vector<1x1x1x1xf32>
    %cst_10 = arith.constant 9.99999974E-6 : f32
    %20 = vector.broadcast %cst_10 : f32 to vector<1x1x1x1xf32>
    %21 = arith.addf %19, %20 : vector<1x1x1x1xf32>
    %22 = math.rsqrt %21 : vector<1x1x1x1xf32>
    %c0_11 = arith.constant 0 : index
    %c0_12 = arith.constant 0 : index
    %c0_13 = arith.constant 0 : index
    %c0_14 = arith.constant 0 : index
    %23 = vector.load %arg3[%c0_11, %c0_12, %c0_13, %c0_14] : memref<1x1x1x1xf32, #tpu.memory_space<vmem>>, vector<1x1x1x1xf32>
    %24 = arith.mulf %23, %22 : vector<1x1x1x1xf32>
    %c0_15 = arith.constant 0 : index
    %c0_16 = arith.constant 0 : index
    %c0_17 = arith.constant 0 : index
    %c0_18 = arith.constant 0 : index
    %25 = vector.load %arg4[%c0_15, %c0_16, %c0_17, %c0_18] : memref<1x1x1x1xf32, #tpu.memory_space<vmem>>, vector<1x1x1x1xf32>
    %26 = arith.mulf %8, %24 : vector<1x1x1x1xf32>
    %27 = arith.subf %25, %26 : vector<1x1x1x1xf32>
    %28 = vector.broadcast %24 : vector<1x1x1x1xf32> to vector<2x1x8x32xf32>
    %29 = arith.mulf %0, %28 : vector<2x1x8x32xf32>
    %30 = vector.broadcast %27 : vector<1x1x1x1xf32> to vector<2x1x8x32xf32>
    %31 = arith.addf %29, %30 : vector<2x1x8x32xf32>
    %32 = vector.shape_cast %31 : vector<2x1x8x32xf32> to vector<16x32xf32>
    %c0_19 = arith.constant 0 : index
    %c0_20 = arith.constant 0 : index
    %33 = vector.load %arg2[%c0_19, %c0_20] : memref<32x128xf32, #tpu.memory_space<vmem>>, vector<32x128xf32>
    %cst_21 = arith.constant dense<0.000000e+00> : vector<16x128xf32>
    %34 = tpu.matmul %32, %33, %cst_21 {dimension_numbers = #tpu.dot_dimension_numbers<[1], [0], [0], [1], [0, 0, 1, 1], [], []>} : vector<16x32xf32>, vector<32x128xf32>, vector<16x128xf32> -> vector<16x128xf32>
    %35 = vector.shape_cast %34 : vector<16x128xf32> to vector<2x1x8x128xf32>
    %c0_22 = arith.constant 0 : index
    %c0_23 = arith.constant 0 : index
    %c0_24 = arith.constant 0 : index
    %c0_25 = arith.constant 0 : index
    %36 = vector.load %arg5[%c0_22, %c0_23, %c0_24, %c0_25] : memref<2x1x8x128xf32, #tpu.memory_space<vmem>>, vector<2x1x8x128xf32>
    tpu.vector_store %arg5[%c0_22, %c0_23, %c0_24, %c0_25], %35 {strides = array<i32>} : memref<2x1x8x128xf32, #tpu.memory_space<vmem>>, vector<2x1x8x128xf32>,
    return
  }
  func.func @transform_0(%arg0: i32) -> (i32, i32, i32, i32) {
    %c0_i32 = arith.constant 0 : i32
    %c0_i32_0 = arith.constant 0 : i32
    %c0_i32_1 = arith.constant 0 : i32
    %c0_i32_2 = arith.constant 0 : i32
    return %c0_i32, %arg0, %c0_i32_0, %c0_i32_1 : i32, i32, i32, i32
  }
  func.func @transform_1(%arg0: i32) -> (i32, i32) {
    %c0_i32 = arith.constant 0 : i32
    %c0_i32_0 = arith.constant 0 : i32
    %c0_i32_1 = arith.constant 0 : i32
    return %c0_i32, %c0_i32_0 : i32, i32
  }
  func.func @transform_2(%arg0: i32) -> (i32, i32, i32, i32) {
    %c0_i32 = arith.constant 0 : i32
    %c0_i32_0 = arith.constant 0 : i32
    %c0_i32_1 = arith.constant 0 : i32
    %c0_i32_2 = arith.constant 0 : i32
    return %c0_i32, %arg0, %c0_i32_0, %c0_i32_1 : i32, i32, i32, i32
  }
  func.func @transform_3(%arg0: i32) -> (i32, i32, i32, i32) {
    %c0_i32 = arith.constant 0 : i32
    %c0_i32_0 = arith.constant 0 : i32
    %c0_i32_1 = arith.constant 0 : i32
    %c0_i32_2 = arith.constant 0 : i32
    return %c0_i32, %arg0, %c0_i32_0, %c0_i32_1 : i32, i32, i32, i32
  }
  func.func @transform_4(%arg0: i32) -> (i32, i32, i32, i32) {
    %c0_i32 = arith.constant 0 : i32
    %c0_i32_0 = arith.constant 0 : i32
    %c0_i32_1 = arith.constant 0 : i32
    %c0_i32_2 = arith.constant 0 : i32
    return %c0_i32, %arg0, %c0_i32_0, %c0_i32_1 : i32, i32, i32, i32
  }
}

</mosaic_0001>

<llo_original>
// kernel: tpu_custom_call.1
$region0: #{tpu_custom_call.1}
  #allocation0 [shape = 'u32[]', space=smem, size = 0x4, offset = 0x4, fixed_abs, tag = 'smem constant byte address 0x4 - core index']
  #allocation1 [shape = 'u32[72,128]{1,0:T(1,128)}', space=vmem, size = 0x9000, scoped, tag = 'internal scratch']
  %s0 = inlined_call_operand.hbm [shape: f32[2,4,8,32], index: 0, kind: input, shape index: {}]
  %s1 = inlined_call_operand.hbm [shape: f32[32,128], index: 1, kind: input, shape index: {}]
  %s2 = inlined_call_operand.vmem [shape: f32[1,4,1,1], index: 2, kind: input, shape index: {}]
  %s3 = inlined_call_operand.vmem [shape: f32[1,4,1,1], index: 3, kind: input, shape index: {}]
  %s4 = inlined_call_operand.hbm [shape: f32[2,4,8,128], index: 4, kind: output, shape index: {}]
  %s5 = sld [smem:[#allocation0]]
  $region57: #{tpu_custom_call.1} parent=0
    _
  %s7 = ssub.s32 1, %s5
  %s8 = scalar_select 0, %s7, %s5
  $region1: #{tpu_custom_call.1} parent=0
    #allocation2 [shape = 'u8[16384]{0}', space=vmem, size = 0x4000, scoped, tag = 'input window, operand 0']
    #allocation3 [shape = 's32[2]{0}', space=sflag, size = 0x8, scoped, tag = 'scoped memory for tpu_custom_call.1']
    #allocation4 [shape = 's32[2]{0}', space=sflag, size = 0x8, scoped, tag = 'scoped memory for tpu_custom_call.1']
    #allocation5 [shape = 'u8[16384]{0}', space=vmem, size = 0x4000, scoped, tag = 'input window, operand 1, single buffered']
    #allocation6 [shape = 's32[1]{0}', space=sflag, size = 0x4, scoped, tag = 'scoped memory for tpu_custom_call.1']
    #allocation7 [shape = 'u8[16384]{0}', space=vmem, size = 0x4000, scoped, tag = 'output window, operand 0']
    %9 = vsyncpa [#allocation3], 0
    %s10 = scalar_lea.sflag [#allocation3], 1
    %11 = vsyncpa %s10, 0
    %12 = vsyncpa [#allocation6], 0
    %13 = vsyncpa [#allocation4], 0
    %s14 = scalar_lea.sflag [#allocation4], 1
    %15 = vsyncpa %s14, 0
    loop: start=0, step=1, limit=6
    $region2: #{tpu_custom_call.1} parent=1 // loop_pre_header
      _
    $region3: #{tpu_custom_call.1} parent=1 // loop_header
      %s17 = sphi 0, %s21
      %p18 = scmp.ge.s32.totalorder %s17, 6
      %s27 = sphi 0, %s29
      %s30 = sphi 0, %s27
      %s31 = sphi 0, %s30
      %s47 = sphi 0, %s31
      %s51 = sphi 0, %s51
      %s53 = sphi 0, %s51
      %s54 = sphi 0, %s53
      %s68 = sphi 0, %s54
      %s74 = sphi 0, %s76
      %s77 = sphi 0, %s74
      %s78 = sphi 0, %s77
      %s94 = sphi 0, %s78
      %s100 = sphi 0, %s102
      %s103 = sphi 0, %s100
      %s104 = sphi 0, %s103
      %s120 = sphi 0, %s104
      %s126 = sphi 0, %s128
      %s129 = sphi 0, %s126
      %s130 = sphi 0, %s129
      %s146 = sphi 0, %s130
    $region4: #{tpu_custom_call.1} parent=1 // loop_header_branch
      %20 = sbr.rel (%p18) target = $region8
    $region5: #{tpu_custom_call.1} parent=1 // loop_body
      %s22 = ssub.s32 %s17, 1
      %s23 = ssub.s32 %s17, 2
      %s24 = sadd.s32 %s17, 1
      %s25 = ssub.s32 %s17, %s24
      %p26 = scmp.eq.s32.totalorder %s25, 0
      %s28 = sadd.s32 %s27, 1
      %s29 = scalar_select %p26, %s27, %s28
      %p32 = pneg %p26
      %p33 = scmp.eq.s32.totalorder %s17, 3
      %p34 = por %p32, %p33
      %p35 = scmp.ne.s32.totalorder %s27, %s30
      %p36 = scmp.eq.s32.totalorder %s17, 0
      %p37 = por %p35, %p36
      %p38 = scmp.ne.s32.totalorder %s27, %s30
      %p39 = scmp.eq.s32.totalorder %s22, 3
      %p40 = por %p38, %p39
      %p41 = scmp.ne.s32.totalorder %s30, %s31
      %p42 = scmp.eq.s32.totalorder %s22, 0
      %p43 = por %p41, %p42
      %p44 = scmp.ne.s32.totalorder %s30, %s31
      %p45 = scmp.eq.s32.totalorder %s23, 3
      %p46 = por %p44, %p45
      %p48 = scmp.ne.s32.totalorder %s31, %s47
      %p49 = scmp.eq.s32.totalorder %s23, 0
      %p50 = por %p48, %p49
      %s52 = sadd.s32 %s51, 1
      %p55 = scmp.eq.s32.totalorder %s17, 3
      %p56 = scmp.ne.s32.totalorder %s51, %s53
      %p57 = scmp.eq.s32.totalorder %s17, 0
      %p58 = por %p56, %p57
      %p59 = scmp.ne.s32.totalorder %s51, %s53
      %p60 = scmp.eq.s32.totalorder %s22, 3
      %p61 = por %p59, %p60
      %p62 = scmp.ne.s32.totalorder %s53, %s54
      %p63 = scmp.eq.s32.totalorder %s22, 0
      %p64 = por %p62, %p63
      %p65 = scmp.ne.s32.totalorder %s53, %s54
      %p66 = scmp.eq.s32.totalorder %s23, 3
      %p67 = por %p65, %p66
      %p69 = scmp.ne.s32.totalorder %s54, %s68
      %p70 = scmp.eq.s32.totalorder %s23, 0
      %p71 = por %p69, %p70
      %s72 = ssub.s32 %s17, %s24
      %p73 = scmp.eq.s32.totalorder %s72, 0
      %s75 = sadd.s32 %s74, 1
      %s76 = scalar_select %p73, %s74, %s75
      %p79 = pneg %p73
      %p80 = scmp.eq.s32.totalorder %s17, 3
      %p81 = por %p79, %p80
      %p82 = scmp.ne.s32.totalorder %s74, %s77
      %p83 = scmp.eq.s32.totalorder %s17, 0
      %p84 = por %p82, %p83
      %p85 = scmp.ne.s32.totalorder %s74, %s77
      %p86 = scmp.eq.s32.totalorder %s22, 3
      %p87 = por %p85, %p86
      %p88 = scmp.ne.s32.totalorder %s77, %s78
      %p89 = scmp.eq.s32.totalorder %s22, 0
      %p90 = por %p88, %p89
      %p91 = scmp.ne.s32.totalorder %s77, %s78
      %p92 = scmp.eq.s32.totalorder %s23, 3
      %p93 = por %p91, %p92
      %p95 = scmp.ne.s32.totalorder %s78, %s94
      %p96 = scmp.eq.s32.totalorder %s23, 0
      %p97 = por %p95, %p96
      %s98 = ssub.s32 %s17, %s24
      %p99 = scmp.eq.s32.totalorder %s98, 0
      %s101 = sadd.s32 %s100, 1
      %s102 = scalar_select %p99, %s100, %s101
      %p105 = pneg %p99
      %p106 = scmp.eq.s32.totalorder %s17, 3
      %p107 = por %p105, %p106
      %p108 = scmp.ne.s32.totalorder %s100, %s103
      %p109 = scmp.eq.s32.totalorder %s17, 0
      %p110 = por %p108, %p109
      %p111 = scmp.ne.s32.totalorder %s100, %s103
      %p112 = scmp.eq.s32.totalorder %s22, 3
      %p113 = por %p111, %p112
      %p114 = scmp.ne.s32.totalorder %s103, %s104
      %p115 = scmp.eq.s32.totalorder %s22, 0
      %p116 = por %p114, %p115
      %p117 = scmp.ne.s32.totalorder %s103, %s104
      %p118 = scmp.eq.s32.totalorder %s23, 3
      %p119 = por %p117, %p118
      %p121 = scmp.ne.s32.totalorder %s104, %s120
      %p122 = scmp.eq.s32.totalorder %s23, 0
      %p123 = por %p121, %p122
      %s124 = ssub.s32 %s17, %s24
      %p125 = scmp.eq.s32.totalorder %s124, 0
      %s127 = sadd.s32 %s126, 1
      %s128 = scalar_select %p125, %s126, %s127
      %p131 = pneg %p125
      %p132 = scmp.eq.s32.totalorder %s17, 3
      %p133 = por %p131, %p132
      %p134 = scmp.ne.s32.totalorder %s126, %s129
      %p135 = scmp.eq.s32.totalorder %s17, 0
      %p136 = por %p134, %p135
      %p137 = scmp.ne.s32.totalorder %s126, %s129
      %p138 = scmp.eq.s32.totalorder %s22, 3
      %p139 = por %p137, %p138
      %p140 = scmp.ne.s32.totalorder %s129, %s130
      %p141 = scmp.eq.s32.totalorder %s22, 0
      %p142 = por %p140, %p141
      %p143 = scmp.ne.s32.totalorder %s129, %s130
      %p144 = scmp.eq.s32.totalorder %s23, 3
      %p145 = por %p143, %p144
      %p147 = scmp.ne.s32.totalorder %s130, %s146
      %p148 = scmp.eq.s32.totalorder %s23, 0
      %p149 = por %p147, %p148
      %p150 = scmp.le.s32.totalorder 1, %s17
      %p151 = scmp.lt.s32.totalorder %s17, 5
      %p152 = pnand %p150, %p151
      %p153 = pneg %p152
      // Predicated region
      $region9: #{tpu_custom_call.1} parent=5 // pred_check
        _
      $region10: #{tpu_custom_call.1} parent=5 // pred_check_branch
        %155 = sbr.rel (%p152) target = $region12
      $region11: #{tpu_custom_call.1} parent=5 // pred_region
        %s156 = ssub.s32 %s17, 1
        // Predicated region
        $region13: #{tpu_custom_call.1} parent=11 // pred_check
          %p157 = pneg %p64
        $region14: #{tpu_custom_call.1} parent=11 // pred_check_branch
          %159 = sbr.rel (%p157) target = $region16
        $region15: #{tpu_custom_call.1} parent=11 // pred_region
          %161 = vsyncadd [#allocation6], 0
          %s162 = sshll.u32 %s1, 4
          %s163 = int_to_ptr.hbm [resolvable:$true] %s162
          %s164 = sshll.u32 [#allocation5], 4
          %s165 = int_to_ptr.vmem [resolvable:$true] %s164
          %170 = dma.hbm_to_vmem [thread:$0]  %s163, 512, %s165, [#allocation6], 128, 128, 8
        $region16: #{tpu_custom_call.1} parent=11 // pred_fallthru
          _
      $region12: #{tpu_custom_call.1} parent=5 // pred_fallthru
        _
      %p171 = scmp.lt.s32.totalorder %s17, 4
      // Predicated region
      $region17: #{tpu_custom_call.1} parent=5 // pred_check
        %p172 = pneg %p171
      $region18: #{tpu_custom_call.1} parent=5 // pred_check_branch
        %174 = sbr.rel (%p172) target = $region20
      $region19: #{tpu_custom_call.1} parent=5 // pred_region
        // Predicated region
        $region21: #{tpu_custom_call.1} parent=19 // pred_check
          %p175 = pneg %p37
        $region22: #{tpu_custom_call.1} parent=19 // pred_check_branch
          %177 = sbr.rel (%p175) target = $region24
        $region23: #{tpu_custom_call.1} parent=19 // pred_region
          %s178 = sand.u32 %s27, 1
          %s179 = scalar_lea.sflag [#allocation3], %s178
          %s180 = sand.u32 %s27, 1
          %s181 = smul.addr %s180, 16
          %s182 = scalar_lea.vmem [#allocation2], %s181
          %184 = vsyncadd %s179, 0
          %s185 = smul.addr %s17, 8
          %s186 = scalar_lea.hbm %s0, %s185
          %s187 = sshll.u32 %s186, 4
          %s188 = int_to_ptr.hbm [resolvable:$true] %s187
          %s189 = sshll.u32 %s182, 4
          %s190 = int_to_ptr.vmem [resolvable:$true] %s189
          %195 = dma.hbm_to_vmem [thread:$0]  %s188, 256, %s190, %s179, 512, 128, 8
        $region24: #{tpu_custom_call.1} parent=19 // pred_fallthru
          _
        // Predicated region
        $region25: #{tpu_custom_call.1} parent=19 // pred_check
          %p196 = pneg %p84
        $region26: #{tpu_custom_call.1} parent=19 // pred_check_branch
          %198 = sbr.rel (%p196) target = $region28
        $region27: #{tpu_custom_call.1} parent=19 // pred_region
          %p199 = scmp.lt.s32.totalorder %s17, 3
          %s200 = scalar_select %p199, %s17, 3
          %s201 = scalar_lea.vmem %s2, %s200
        $region28: #{tpu_custom_call.1} parent=19 // pred_fallthru
          _
        // Predicated region
        $region29: #{tpu_custom_call.1} parent=19 // pred_check
          %p202 = pneg %p110
        $region30: #{tpu_custom_call.1} parent=19 // pred_check_branch
          %204 = sbr.rel (%p202) target = $region32
        $region31: #{tpu_custom_call.1} parent=19 // pred_region
          %p205 = scmp.lt.s32.totalorder %s17, 3
          %s206 = scalar_select %p205, %s17, 3
          %s207 = scalar_lea.vmem %s3, %s206
        $region32: #{tpu_custom_call.1} parent=19 // pred_fallthru
          _
      $region20: #{tpu_custom_call.1} parent=5 // pred_fallthru
        _
      %p208 = scmp.le.s32.totalorder 1, %s17
      %p209 = scmp.lt.s32.totalorder %s17, 5
      %p210 = pnand %p208, %p209
      %p211 = pneg %p210
      // Predicated region
      $region33: #{tpu_custom_call.1} parent=5 // pred_check
        _
      $region34: #{tpu_custom_call.1} parent=5 // pred_check_branch
        %213 = sbr.rel (%p210) target = $region36
      $region35: #{tpu_custom_call.1} parent=5 // pred_region
        %s214 = ssub.s32 %s17, 1
        %s215 = sand.u32 %s30, 1
        %s216 = scalar_lea.sflag [#allocation3], %s215
        %s217 = sand.u32 %s30, 1
        %s218 = smul.addr %s217, 16
        %s219 = scalar_lea.vmem [#allocation2], %s218
        // Predicated region
        $region37: #{tpu_custom_call.1} parent=35 // pred_check
          %p220 = pneg %p43
        $region38: #{tpu_custom_call.1} parent=35 // pred_check_branch
          %222 = sbr.rel (%p220) target = $region40
        $region39: #{tpu_custom_call.1} parent=35 // pred_region
          %224 = dma.done %s216, 256
        $region40: #{tpu_custom_call.1} parent=35 // pred_fallthru
          _
        // Predicated region
        $region41: #{tpu_custom_call.1} parent=35 // pred_check
          %p225 = pneg %p64
        $region42: #{tpu_custom_call.1} parent=35 // pred_check_branch
          %227 = sbr.rel (%p225) target = $region44
        $region43: #{tpu_custom_call.1} parent=35 // pred_region
          %229 = dma.done [#allocation6], 512
        $region44: #{tpu_custom_call.1} parent=35 // pred_fallthru
          _
        %s230 = sand.u32 %s30, 1
        %s231 = scalar_lea.sflag [#allocation3], %s230
        %s232 = sand.u32 %s30, 1
        %s233 = smul.addr %s232, 16
        %s234 = scalar_lea.vmem [#allocation2], %s233
        %p235 = pneg %p43
        %p236 = pneg %p40
        %p237 = pneg %p64
        %p238 = pneg %p61
        %p239 = scmp.lt.s32.totalorder %s22, 3
        %s240 = scalar_select %p239, %s22, 3
        %s241 = scalar_lea.vmem %s2, %s240
        %p242 = pneg %p90
        %p243 = pneg %p87
        %p244 = scmp.lt.s32.totalorder %s22, 3
        %s245 = scalar_select %p244, %s22, 3
        %s246 = scalar_lea.vmem %s3, %s245
        %p247 = pneg %p116
        %p248 = pneg %p113
        %p249 = pneg %p142
        %p250 = pneg %p139
        %s251 = sand.u32 %s129, 1
        %s252 = scalar_lea.sflag [#allocation4], %s251
        %s253 = sand.u32 %s129, 1
        %s254 = smul.addr %s253, 16
        %s255 = scalar_lea.vmem [#allocation7], %s254
        %p256 = scmp.lt.s32.totalorder %s22, 3
        %s257 = scalar_select %p256, %s22, 3
        %s258 = scalar_lea.vmem %s2, %s257
        %p259 = scmp.lt.s32.totalorder %s22, 3
        %s260 = scalar_select %p259, %s22, 3
        %s261 = scalar_lea.vmem %s3, %s260
        %v262 = vld [vmem:[%s219] sm:$0xff]
        %v263 = vld [vmem:[%s219 + $0x8] sm:$0xff]
        %vm264 = vcmask 261120
        %v265 = vsel %vm264, %v262, 0.0
        %266 = vadd.xlane.f32.xlu0 %v265
        %v267 = vpop.xlane.xlu0 %266
        %v268 = vsel %vm264, %v263, 0.0
        %269 = vadd.xlane.f32.xlu0 %v268
        %v270 = vpop.xlane.xlu0 %269
        %v271 = vrot.slane %v267, 4
        %v272 = vadd.f32 %v267, %v271
        %v273 = vrot.slane %v272, 2
        %v274 = vadd.f32 %v272, %v273
        %v275 = vrot.slane %v274, 1
        %v276 = vadd.f32 %v274, %v275
        %v277 = vrot.slane %v270, 4
        %v278 = vadd.f32 %v270, %v277
        %v279 = vrot.slane %v278, 2
        %v280 = vadd.f32 %v278, %v279
        %v281 = vrot.slane %v280, 1
        %v282 = vadd.f32 %v280, %v281
        %v283 = vadd.f32 %v276, %v282
        %v284 = vrcp.pop 512.0
        %v285 = vmul.f32 512.0, %v284
        %v286 = vsub.f32 1.0, %v285
        %v287 = vmul.f32 %v284, %v286
        %v288 = vadd.f32 %v284, %v287
        %vm289 = vweird.f32 %v284
        %v290 = vsel %vm289, %v284, %v288
        %v291 = vmul.f32 %v283, %v290
        %v292 = vsub.f32 %v262, %v291
        %v293 = vsub.f32 %v263, %v291
        %v294 = vmul.f32 %v292, %v292
        %v295 = vmul.f32 %v293, %v293
        %v296 = vsel %vm264, %v294, 0.0
        %297 = vadd.xlane.f32.xlu0 %v296
        %v298 = vpop.xlane.xlu0 %297
        %v299 = vsel %vm264, %v295, 0.0
        %300 = vadd.xlane.f32.xlu0 %v299
        %v301 = vpop.xlane.xlu0 %300
        %v302 = vrot.slane %v298, 4
        %v303 = vadd.f32 %v298, %v302
        %v304 = vrot.slane %v303, 2
        %v305 = vadd.f32 %v303, %v304
        %v306 = vrot.slane %v305, 1
        %v307 = vadd.f32 %v305, %v306
        %v308 = vrot.slane %v301, 4
        %v309 = vadd.f32 %v301, %v308
        %v310 = vrot.slane %v309, 2
        %v311 = vadd.f32 %v309, %v310
        %v312 = vrot.slane %v311, 1
        %v313 = vadd.f32 %v311, %v312
        %v314 = vadd.f32 %v307, %v313
        %v315 = vmul.f32 %v314, %v290
        %v316 = vadd.f32 %v315, 1e-05
        %v317 = vrsqrt.pop %v316
        %v318 = vmul.f32 %v317, %v316
        %v319 = vmul.f32 %v318, %v317
        %v320 = vmul.f32 0.5, %v319
        %v321 = vsub.f32 1.5, %v320
        %v322 = vmul.f32 %v317, %v321
        %vm323 = vweird.f32 %v316
        %vm324 = vweird.f32 %v317
        %vm325 = vmor %vm323, %vm324
        %v326 = vsel %vm325, %v317, %v322
        %v327 = vld [vmem:[%s258] sm:$0x1]
        %v328 = vmul.f32 %v327, %v326
        %v329 = vld [vmem:[%s261] sm:$0x1]
        %v330 = vmul.f32 %v291, %v328
        %v331 = vsub.f32 %v329, %v330
        %v333 = vperm.slane %v328, 0
        %334 = vset.pattern.permute.xlu0 0
        %335 = vperm.xlu0 %334, %v333
        %v336 = vpop.permute.xlu0 %335
        %v338 = vmul.f32 %v262, %v336
        %v339 = vmul.f32 %v263, %v336
        %v341 = vperm.slane %v331, 0
        %342 = vset.pattern.permute.xlu0 0
        %343 = vperm.xlu0 %342, %v341
        %v344 = vpop.permute.xlu0 %343
        %v346 = vadd.f32 %v338, %v344
        %v347 = vadd.f32 %v339, %v344
        %v348 = vld [vmem:[#allocation5] sm:$0xff]
        %v349 = vld [vmem:[#allocation5 + $0x8] sm:$0xff]
        %v350 = vld [vmem:[#allocation5 + $0x10] sm:$0xff]
        %v351 = vld [vmem:[#allocation5 + $0x18] sm:$0xff]
        %v353 = vsel %vm264, %v346, 0
        %v356 = vsel %vm264, %v347, 0
        %358 = vmatpush.msra.mxu0 0.0
        %359 = vmatpush.msra.mxu0 0.0
        %360 = vmatpush.msra.mxu0 0.0
        %361 = vmatpush.msra.mxu0 0.0
        %362 = vmatpush.msra.mxu0 0.0
        %363 = vmatpush.msra.mxu0 0.0
        %364 = vmatpush.msra.mxu0 0.0
        %365 = vmatpush.msra.mxu0 0.0
        %366 = vmatpush.msra.mxu0 0.0
        %367 = vmatpush.msra.mxu0 0.0
        %368 = vmatpush.msra.mxu0 0.0
        %369 = vmatpush.msra.mxu0 0.0
        %370 = vmatpush.msra.mxu0 %v351
        %371 = vmatpush.msra.mxu0 %v350
        %372 = vmatpush.msra.mxu0 %v349
        %373 = vmatpush.msra.mxu0 %v348
        %374 = vmatmul.f32.gmra.mxu0 %v353
        %v375 = vpop.f32.mrf.mxu0
        %v376 = vadd.f32 0.0, %v375
        %377 = vmatmul.f32.gmra.mxu0 %v356
        %v378 = vpop.f32.mrf.mxu0
        %v379 = vadd.f32 0.0, %v378
        %380 = vdwg.mxu0
        %381 = vst [vmem:[%s255] sm:$0xff] %v376
        %382 = vst [vmem:[%s255 + $0x8] sm:$0xff] %v379
        %s383 = sand.u32 %s129, 1
        %s384 = scalar_lea.sflag [#allocation4], %s383
        %s385 = sand.u32 %s129, 1
        %s386 = smul.addr %s385, 16
        %s387 = scalar_lea.vmem [#allocation7], %s386
        // Predicated region
        $region45: #{tpu_custom_call.1} parent=35 // pred_check
          %p388 = pneg %p139
        $region46: #{tpu_custom_call.1} parent=35 // pred_check_branch
          %390 = sbr.rel (%p388) target = $region48
        $region47: #{tpu_custom_call.1} parent=35 // pred_region
          %392 = vsyncadd %s384, 0
          %s393 = smul.addr %s22, 8
          %s394 = scalar_lea.hbm %s4, %s393
          %s395 = sshll.u32 %s387, 4
          %s396 = int_to_ptr.vmem [resolvable:$true] %s395
          %s397 = sshll.u32 %s394, 4
          %s398 = int_to_ptr.hbm [resolvable:$true] %s397
          %403 = dma.vmem_to_hbm [thread:$0]  %s396, 256, %s398, %s384, 128, 512, 8
        $region48: #{tpu_custom_call.1} parent=35 // pred_fallthru
          _
      $region36: #{tpu_custom_call.1} parent=5 // pred_fallthru
        _
      %p404 = scmp.le.s32.totalorder 2, %s17
      // Predicated region
      $region49: #{tpu_custom_call.1} parent=5 // pred_check
        %p405 = pneg %p404
      $region50: #{tpu_custom_call.1} parent=5 // pred_check_branch
        %407 = sbr.rel (%p405) target = $region52
      $region51: #{tpu_custom_call.1} parent=5 // pred_region
        %s408 = ssub.s32 %s17, 2
        // Predicated region
        $region53: #{tpu_custom_call.1} parent=51 // pred_check
          %p409 = pneg %p145
        $region54: #{tpu_custom_call.1} parent=51 // pred_check_branch
          %411 = sbr.rel (%p409) target = $region56
        $region55: #{tpu_custom_call.1} parent=51 // pred_region
          %s412 = sand.u32 %s130, 1
          %s413 = scalar_lea.sflag [#allocation4], %s412
          %s414 = sand.u32 %s130, 1
          %s415 = smul.addr %s414, 16
          %s416 = scalar_lea.vmem [#allocation7], %s415
          %418 = dma.done %s413, 256
        $region56: #{tpu_custom_call.1} parent=51 // pred_fallthru
          _
      $region52: #{tpu_custom_call.1} parent=5 // pred_fallthru
        _
    $region6: #{tpu_custom_call.1} parent=1 // loop_footer
      %s21 = sadd.s32 1, %s17
    $region7: #{tpu_custom_call.1} parent=1 // loop_footer_branch
      %16 = sbr.rel target = $region3
    $region8: #{tpu_custom_call.1} parent=1 // loop_exit
      _
    %419 = vsyncpa [#allocation3], 1
    %s420 = scalar_lea.sflag [#allocation3], 1
    %421 = vsyncpa %s420, 1
    %422 = vsyncpa [#allocation6], 1
    %423 = vsyncpa [#allocation4], 1
    %s424 = scalar_lea.sflag [#allocation4], 1
    %425 = vsyncpa %s424, 1

</llo_original>
